<compile_context>
chip_gen: v5e
topology: v5e:2x2
jax: 0.10.0
libtpu: 0.0.40
codegen_flags: <defaults>
</compile_context>

<pallas_src>
import functools

import jax
import jax.numpy as jnp
from jax.experimental import pallas as pl
from jax.experimental.pallas import tpu as pltpu

LANE = 128
SUBLANE = 8
MAX_ROWS_TILE = 1024  # 1024 * 128 boxes per step -> ~4 MiB of input per step


def _cdiv(a, b):
    return -(-a // b)


# ---------------------------------------------------------------------------
# Kernel bodies
# ---------------------------------------------------------------------------
def _diou_tile(b_ref, eps):
    """b_ref: (2, 4, rows_tile, LANE). Returns per-box loss (rows_tile, LANE)."""
    px1 = b_ref[0, 0]
    py1 = b_ref[0, 1]
    px2 = b_ref[0, 2]
    py2 = b_ref[0, 3]

    tx1 = b_ref[1, 0]
    ty1 = b_ref[1, 1]
    tx2 = b_ref[1, 2]
    ty2 = b_ref[1, 3]

    # intersection
    w = jnp.maximum(jnp.minimum(px2, tx2) - jnp.maximum(px1, tx1), 0.0)
    h = jnp.maximum(jnp.minimum(py2, ty2) - jnp.maximum(py1, ty1), 0.0)
    overlap = w * h

    # union & IoU (exact reciprocal; approx=True would relax to ~1e-3 error)
    ap = (px2 - px1) * (py2 - py1)
    ag = (tx2 - tx1) * (ty2 - ty1)
    union = ap + ag - overlap + eps
    ious = overlap * pl.reciprocal(union, approx=False)

    # smallest enclosing box diagonal^2
    cw = jnp.maximum(jnp.maximum(px2, tx2) - jnp.minimum(px1, tx1), 0.0)
    ch = jnp.maximum(jnp.maximum(py2, ty2) - jnp.minimum(py1, ty1), 0.0)
    c2 = cw * cw + ch * ch + eps

    # center-distance^2
    left = ((tx1 + tx2) - (px1 + px2)) ** 2 * 0.25
    right = ((ty1 + ty2) - (py1 + py2)) ** 2 * 0.25
    rho2 = left + right

    dious = ious - rho2 * pl.reciprocal(c2, approx=False)
    return 1.0 - dious


def _diou_none_kernel(b_ref, out_ref, *, eps):
    out_ref[...] = _diou_tile(b_ref, eps)


def _diou_sum_kernel(b_ref, *rest, eps, n, rows_tile, has_weight):
    if has_weight:
        w_ref, out_ref = rest
    else:
        (out_ref,) = rest

    loss = _diou_tile(b_ref, eps)
    if has_weight:
        loss = loss * w_ref[...]

    # mask padded boxes (global box index >= n) so they contribute 0
    rows = jax.lax.broadcasted_iota(jnp.int32, (rows_tile, LANE), 0)
    lanes = jax.lax.broadcasted_iota(jnp.int32, (rows_tile, LANE), 1)
    gidx = (pl.program_id(0) * rows_tile + rows) * LANE + lanes
    loss = jnp.where(gidx < n, loss, 0.0)

    # per-step partial sum, scattered into element [0, 0] of this step's tile
    s = jnp.sum(loss)
    r8 = jax.lax.broadcasted_iota(jnp.int32, (SUBLANE, LANE), 0)
    l8 = jax.lax.broadcasted_iota(jnp.int32, (SUBLANE, LANE), 1)
    out_ref[0] = jnp.where((r8 == 0) & (l8 == 0), s, jnp.float32(0.0))


# ---------------------------------------------------------------------------
# Host-side helpers
# ---------------------------------------------------------------------------
def _tiling(n):
    """Returns (rows_tile, num_steps, r_pad)."""
    r = max(1, _cdiv(n, LANE))          # number of 128-wide rows of boxes
    r8 = _cdiv(r, SUBLANE) * SUBLANE    # round to sublane multiple
    if r8 <= SUBLANE:
        rows_tile = r8                  # single tiny step
    else:
        # at least 2 grid steps so the 'parallel' axis can shard across
        # v7x's two TensorCores, capped at MAX_ROWS_TILE per step
        half = _cdiv(r8, 2)
        rows_tile = min(MAX_ROWS_TILE, _cdiv(half, SUBLANE) * SUBLANE)
    num_steps = _cdiv(r8, rows_tile)
    r_pad = num_steps * rows_tile
    return rows_tile, num_steps, r_pad


def _to_slab(pred, target, r_pad):
    """(n,4)+(n,4) -> (2, 4, r_pad, LANE) coordinate-major float32 slab."""
    n = pred.shape[0]
    n_pad = r_pad * LANE
    boxes = jnp.stack([pred, target]).astype(jnp.float32)      # (2, n, 4)
    boxes = jnp.transpose(boxes, (0, 2, 1))                     # (2, 4, n)
    boxes = jnp.pad(boxes, ((0, 0), (0, 0), (0, n_pad - n)))
    return boxes.reshape(2, 4, r_pad, LANE)


def _diou_loss_per_box(pred, target, eps):
    """pred, target: (n, 4). Returns per-box loss (n,) float32."""
    n = pred.shape[0]
    rows_tile, num_steps, r_pad = _tiling(n)
    boxes = _to_slab(pred, target, r_pad)

    out = pl.pallas_call(
        functools.partial(_diou_none_kernel, eps=eps),
        out_shape=jax.ShapeDtypeStruct((r_pad, LANE), jnp.float32),
        grid=(num_steps,),
        in_specs=[
            pl.BlockSpec((2, 4, rows_tile, LANE), lambda i: (0, 0, i, 0)),
        ],
        out_specs=pl.BlockSpec((rows_tile, LANE), lambda i: (i, 0)),
        compiler_params=pltpu.CompilerParams(dimension_semantics=("parallel",)),
    )(boxes)

    # padded lanes evaluate to loss == 1.0; slice them off
    return out.reshape(-1)[:n]


def _diou_loss_sum(pred, target, weight, eps):
    """Fused masked (weighted) sum of per-box DIoU losses. Returns scalar f32."""
    n = pred.shape[0]
    rows_tile, num_steps, r_pad = _tiling(n)
    n_pad = r_pad * LANE
    boxes = _to_slab(pred, target, r_pad)

    has_weight = weight is not None
    in_specs = [pl.BlockSpec((2, 4, rows_tile, LANE), lambda i: (0, 0, i, 0))]
    args = [boxes]
    if has_weight:
        w = weight.astype(jnp.float32).reshape(-1)
        w = jnp.pad(w, (0, n_pad - n)).reshape(r_pad, LANE)
        in_specs.append(pl.BlockSpec((rows_tile, LANE), lambda i: (i, 0)))
        args.append(w)

    out = pl.pallas_call(
        functools.partial(
            _diou_sum_kernel,
            eps=eps,
            n=n,
            rows_tile=rows_tile,
            has_weight=has_weight,
        ),
        out_shape=jax.ShapeDtypeStruct((num_steps, SUBLANE, LANE), jnp.float32),
        grid=(num_steps,),
        in_specs=in_specs,
        out_specs=pl.BlockSpec((1, SUBLANE, LANE), lambda i: (i, 0, 0)),
        compiler_params=pltpu.CompilerParams(dimension_semantics=("parallel",)),
    )(*args)

    # tiny (num_steps, 8, 128) array of per-step partial sums (only [i,0,0] nonzero)
    return jnp.sum(out)


# ---------------------------------------------------------------------------
# Module wrapper
# ---------------------------------------------------------------------------
class DIoULoss:
    """JAX/Pallas port of the PyTorch DIoULoss module (forward pass only)."""

    def __init__(self, eps=1e-6, reduction="mean", loss_weight=1.0):
        self.eps = eps
        self.reduction = reduction
        self.loss_weight = loss_weight

    def __call__(self, pred, target, weight=None, avg_factor=None,
                 reduction_override=None):
        assert reduction_override in (None, "none", "mean", "sum")
        reduction = reduction_override if reduction_override else self.reduction

        # TODO(synk): the PyTorch fast path "weight has no positive entries ->
        # return (pred * weight).sum()" is a data-dependent branch with a
        # different output shape; not implemented here.

        if weight is not None and weight.ndim > 1:
            assert weight.shape == pred.shape
            weight = weight.mean(-1)

        n = pred.shape[0]

        if reduction == "none":
            loss = _diou_loss_per_box(pred, target, self.eps)  # (n,)
            if weight is not None:
                loss = loss * weight.astype(loss.dtype)
            # (avg_factor with reduction='none' leaves the loss unchanged,
            #  matching mmdet's weight_reduce_loss)
            return self.loss_weight * loss

        # 'mean' / 'sum': fused in-kernel weight multiply + masked reduction
        total = _diou_loss_sum(pred, target, weight, self.eps)

        if avg_factor is None:
            if reduction == "mean":
                total = total / n   # n == 0 -> NaN, same as torch.mean of empty
            # 'sum': use total as-is
        else:
            if reduction == "mean":
                total = total / avg_factor
            else:
                raise ValueError(
                    'avg_factor can not be used with reduction="sum"')

        return self.loss_weight * total


# ---------------------------------------------------------------------------
# Self-test
# ---------------------------------------------------------------------------
def _make_boxes(key, n):
    k1, k2 = jax.random.split(key)
    xy = jax.random.uniform(k1, (n, 2), jnp.float32, 0.0, 10.0)
    wh = jax.random.uniform(k2, (n, 2), jnp.float32, 0.5, 5.0)
    return jnp.concatenate([xy, xy + wh], axis=-1)  # (x1, y1, x2, y2)


def _ref_diou(p, t, eps=1e-6):
    lt = jnp.maximum(p[:, :2], t[:, :2])
    rb = jnp.minimum(p[:, 2:], t[:, 2:])
    wh = jnp.maximum(rb - lt, 0.0)
    overlap = wh[:, 0] * wh[:, 1]
    ap = (p[:, 2] - p[:, 0]) * (p[:, 3] - p[:, 1])
    ag = (t[:, 2] - t[:, 0]) * (t[:, 3] - t[:, 1])
    union = ap + ag - overlap + eps
    ious = overlap / union
    e1 = jnp.minimum(p[:, :2], t[:, :2])
    e2 = jnp.maximum(p[:, 2:], t[:, 2:])
    ewh = jnp.maximum(e2 - e1, 0.0)
    c2 = ewh[:, 0] ** 2 + ewh[:, 1] ** 2 + eps
    left = (t[:, 0] + t[:, 2] - (p[:, 0] + p[:, 2])) ** 2 / 4
    right = (t[:, 1] + t[:, 3] - (p[:, 1] + p[:, 3])) ** 2 / 4
    rho2 = left + right
    return 1.0 - (ious - rho2 / c2)


if __name__ == "__main__":
    key = jax.random.PRNGKey(0)
    kp, kt, kw = jax.random.split(key, 3)

    module = DIoULoss(eps=1e-6, reduction="mean", loss_weight=1.0)

    # test 1: small n=8, mean reduction (fused-sum path)
    n = 8
    pred = _make_boxes(kp, n)       # (8, 4)
    target = _make_boxes(kt, n)     # (8, 4)
    loss = module(pred, target)
    jax.block_until_ready(loss)
    ref = jnp.mean(_ref_diou(pred, target))
    assert jnp.allclose(loss, ref, atol=1e-5, rtol=1e-5), (loss, ref)

    # test 2: n=300 (exercises lane/sublane padding + masking), 'sum'
    n2 = 300
    kp2, kt2 = jax.random.split(jax.random.PRNGKey(1))
    pred2 = _make_boxes(kp2, n2)
    target2 = _make_boxes(kt2, n2)
    loss2 = module(pred2, target2, reduction_override="sum")
    jax.block_until_ready(loss2)
    ref2 = jnp.sum(_ref_diou(pred2, target2))
    assert jnp.allclose(loss2, ref2, atol=1e-3, rtol=1e-5), (loss2, ref2)

    # test 3: weighted mean with avg_factor (fused weight multiply)
    w = jax.random.uniform(kw, (n2,), jnp.float32, 0.0, 2.0)
    loss3 = module(pred2, target2, weight=w, avg_factor=50.0)
    jax.block_until_ready(loss3)
    ref3 = jnp.sum(_ref_diou(pred2, target2) * w) / 50.0
    assert jnp.allclose(loss3, ref3, atol=1e-3, rtol=1e-5), (loss3, ref3)

    # test 4: reduction='none' (per-box kernel path)
    loss4 = module(pred2, target2, reduction_override="none")
    jax.block_until_ready(loss4)
    ref4 = _ref_diou(pred2, target2)
    assert loss4.shape == (n2,)
    assert jnp.allclose(loss4, ref4, atol=1e-5, rtol=1e-5), "reduction=none mismatch"

    print("KERNEL_OK")
</pallas_src>

<mosaic_0001>
module attributes {stable_mosaic.version = 11 : i64} {
  func.func @_diou_sum_kernel(%arg0: i32, %arg1: memref<2x4x8x128xf32, #tpu.memory_space<vmem>>, %arg2: memref<1x8x128xf32, #tpu.memory_space<vmem>>) attributes {dimension_semantics = [#tpu.dimension_semantics<parallel>], iteration_bounds = array<i64: 1>, scalar_prefetch = 0 : i64, scratch_operands = 0 : i64, tpu.core_type = #tpu.core_type<tc>, window_params = [{transform_indices = @transform_0, window_bounds = array<i64: 2, 4, 8, 128>}, {transform_indices = @transform_1, window_bounds = array<i64: 1, 8, 128>}]} {
    %c0 = arith.constant 0 : index
    %c0_0 = arith.constant 0 : index
    %c0_1 = arith.constant 0 : index
    %c0_2 = arith.constant 0 : index
    %0 = vector.load %arg1[%c0, %c0_0, %c0_1, %c0_2] : memref<2x4x8x128xf32, #tpu.memory_space<vmem>>, vector<1x1x8x128xf32>
    %1 = vector.shape_cast %0 : vector<1x1x8x128xf32> to vector<8x128xf32>
    %c0_3 = arith.constant 0 : index
    %c1 = arith.constant 1 : index
    %c0_4 = arith.constant 0 : index
    %c0_5 = arith.constant 0 : index
    %2 = vector.load %arg1[%c0_3, %c1, %c0_4, %c0_5] : memref<2x4x8x128xf32, #tpu.memory_space<vmem>>, vector<1x1x8x128xf32>
    %3 = vector.shape_cast %2 : vector<1x1x8x128xf32> to vector<8x128xf32>
    %c0_6 = arith.constant 0 : index
    %c2 = arith.constant 2 : index
    %c0_7 = arith.constant 0 : index
    %c0_8 = arith.constant 0 : index
    %4 = vector.load %arg1[%c0_6, %c2, %c0_7, %c0_8] : memref<2x4x8x128xf32, #tpu.memory_space<vmem>>, vector<1x1x8x128xf32>
    %5 = vector.shape_cast %4 : vector<1x1x8x128xf32> to vector<8x128xf32>
    %c0_9 = arith.constant 0 : index
    %c3 = arith.constant 3 : index
    %c0_10 = arith.constant 0 : index
    %c0_11 = arith.constant 0 : index
    %6 = vector.load %arg1[%c0_9, %c3, %c0_10, %c0_11] : memref<2x4x8x128xf32, #tpu.memory_space<vmem>>, vector<1x1x8x128xf32>
    %7 = vector.shape_cast %6 : vector<1x1x8x128xf32> to vector<8x128xf32>
    %c1_12 = arith.constant 1 : index
    %c0_13 = arith.constant 0 : index
    %c0_14 = arith.constant 0 : index
    %c0_15 = arith.constant 0 : index
    %8 = vector.load %arg1[%c1_12, %c0_13, %c0_14, %c0_15] : memref<2x4x8x128xf32, #tpu.memory_space<vmem>>, vector<1x1x8x128xf32>
    %9 = vector.shape_cast %8 : vector<1x1x8x128xf32> to vector<8x128xf32>
    %c1_16 = arith.constant 1 : index
    %c1_17 = arith.constant 1 : index
    %c0_18 = arith.constant 0 : index
    %c0_19 = arith.constant 0 : index
    %10 = vector.load %arg1[%c1_16, %c1_17, %c0_18, %c0_19] : memref<2x4x8x128xf32, #tpu.memory_space<vmem>>, vector<1x1x8x128xf32>
    %11 = vector.shape_cast %10 : vector<1x1x8x128xf32> to vector<8x128xf32>
    %c1_20 = arith.constant 1 : index
    %c2_21 = arith.constant 2 : index
    %c0_22 = arith.constant 0 : index
    %c0_23 = arith.constant 0 : index
    %12 = vector.load %arg1[%c1_20, %c2_21, %c0_22, %c0_23] : memref<2x4x8x128xf32, #tpu.memory_space<vmem>>, vector<1x1x8x128xf32>
    %13 = vector.shape_cast %12 : vector<1x1x8x128xf32> to vector<8x128xf32>
    %c1_24 = arith.constant 1 : index
    %c3_25 = arith.constant 3 : index
    %c0_26 = arith.constant 0 : index
    %c0_27 = arith.constant 0 : index
    %14 = vector.load %arg1[%c1_24, %c3_25, %c0_26, %c0_27] : memref<2x4x8x128xf32, #tpu.memory_space<vmem>>, vector<1x1x8x128xf32>
    %15 = vector.shape_cast %14 : vector<1x1x8x128xf32> to vector<8x128xf32>
    %16 = arith.minimumf %5, %13 : vector<8x128xf32>
    %17 = arith.maximumf %1, %9 : vector<8x128xf32>
    %18 = arith.subf %16, %17 : vector<8x128xf32>
    %cst = arith.constant 0.000000e+00 : f32
    %19 = vector.broadcast %cst : f32 to vector<8x128xf32>
    %20 = arith.maximumf %18, %19 : vector<8x128xf32>
    %21 = arith.minimumf %7, %15 : vector<8x128xf32>
    %22 = arith.maximumf %3, %11 : vector<8x128xf32>
    %23 = arith.subf %21, %22 : vector<8x128xf32>
    %cst_28 = arith.constant 0.000000e+00 : f32
    %24 = vector.broadcast %cst_28 : f32 to vector<8x128xf32>
    %25 = arith.maximumf %23, %24 : vector<8x128xf32>
    %26 = arith.mulf %20, %25 : vector<8x128xf32>
    %27 = arith.subf %5, %1 : vector<8x128xf32>
    %28 = arith.subf %7, %3 : vector<8x128xf32>
    %29 = arith.mulf %27, %28 : vector<8x128xf32>
    %30 = arith.subf %13, %9 : vector<8x128xf32>
    %31 = arith.subf %15, %11 : vector<8x128xf32>
    %32 = arith.mulf %30, %31 : vector<8x128xf32>
    %33 = arith.addf %29, %32 : vector<8x128xf32>
    %34 = arith.subf %33, %26 : vector<8x128xf32>
    %cst_29 = arith.constant 9.99999997E-7 : f32
    %35 = vector.broadcast %cst_29 : f32 to vector<8x128xf32>
    %36 = arith.addf %34, %35 : vector<8x128xf32>
    %37 = tpu.reciprocal %36 : vector<8x128xf32> -> vector<8x128xf32>
    %38 = arith.mulf %26, %37 : vector<8x128xf32>
    %39 = arith.maximumf %5, %13 : vector<8x128xf32>
    %40 = arith.minimumf %1, %9 : vector<8x128xf32>
    %41 = arith.subf %39, %40 : vector<8x128xf32>
    %cst_30 = arith.constant 0.000000e+00 : f32
    %42 = vector.broadcast %cst_30 : f32 to vector<8x128xf32>
    %43 = arith.maximumf %41, %42 : vector<8x128xf32>
    %44 = arith.maximumf %7, %15 : vector<8x128xf32>
    %45 = arith.minimumf %3, %11 : vector<8x128xf32>
    %46 = arith.subf %44, %45 : vector<8x128xf32>
    %cst_31 = arith.constant 0.000000e+00 : f32
    %47 = vector.broadcast %cst_31 : f32 to vector<8x128xf32>
    %48 = arith.maximumf %46, %47 : vector<8x128xf32>
    %49 = arith.mulf %43, %43 : vector<8x128xf32>
    %50 = arith.mulf %48, %48 : vector<8x128xf32>
    %51 = arith.addf %49, %50 : vector<8x128xf32>
    %cst_32 = arith.constant 9.99999997E-7 : f32
    %52 = vector.broadcast %cst_32 : f32 to vector<8x128xf32>
    %53 = arith.addf %51, %52 : vector<8x128xf32>
    %54 = arith.addf %9, %13 : vector<8x128xf32>
    %55 = arith.addf %1, %5 : vector<8x128xf32>
    %56 = arith.subf %54, %55 : vector<8x128xf32>
    %57 = arith.mulf %56, %56 : vector<8x128xf32>
    %cst_33 = arith.constant 2.500000e-01 : f32
    %58 = vector.broadcast %cst_33 : f32 to vector<8x128xf32>
    %59 = arith.mulf %57, %58 : vector<8x128xf32>
    %60 = arith.addf %11, %15 : vector<8x128xf32>
    %61 = arith.addf %3, %7 : vector<8x128xf32>
    %62 = arith.subf %60, %61 : vector<8x128xf32>
    %63 = arith.mulf %62, %62 : vector<8x128xf32>
    %cst_34 = arith.constant 2.500000e-01 : f32
    %64 = vector.broadcast %cst_34 : f32 to vector<8x128xf32>
    %65 = arith.mulf %63, %64 : vector<8x128xf32>
    %66 = arith.addf %59, %65 : vector<8x128xf32>
    %67 = tpu.reciprocal %53 : vector<8x128xf32> -> vector<8x128xf32>
    %68 = arith.mulf %66, %67 : vector<8x128xf32>
    %69 = arith.subf %38, %68 : vector<8x128xf32>
    %cst_35 = arith.constant 1.000000e+00 : f32
    %70 = vector.broadcast %cst_35 : f32 to vector<8x128xf32>
    %71 = arith.subf %70, %69 : vector<8x128xf32>
    %72 = tpu.iota {dimensions = array<i32: 0>} : vector<8x128xi32>
    %73 = tpu.iota {dimensions = array<i32: 1>} : vector<8x128xi32>
    %c8_i32 = arith.constant 8 : i32
    %74 = arith.muli %arg0, %c8_i32 : i32
    %75 = vector.broadcast %74 : i32 to vector<8x128xi32>
    %76 = arith.addi %75, %72 : vector<8x128xi32>
    %c128_i32 = arith.constant 128 : i32
    %77 = vector.broadcast %c128_i32 : i32 to vector<8x128xi32>
    %78 = arith.muli %76, %77 : vector<8x128xi32>
    %79 = arith.addi %78, %73 : vector<8x128xi32>
    %c8_i32_36 = arith.constant 8 : i32
    %80 = vector.broadcast %c8_i32_36 : i32 to vector<8x128xi32>
    %81 = arith.cmpi slt, %79, %80 : vector<8x128xi32>
    %cst_37 = arith.constant 0.000000e+00 : f32
    %82 = vector.broadcast %cst_37 : f32 to vector<8x128xf32>
    %83 = arith.select %81, %71, %82 : vector<8x128xi1>, vector<8x128xf32>
    %84 = vector.shape_cast %83 : vector<8x128xf32> to vector<1x8x128xf32>
    %cst_38 = arith.constant dense<0.000000e+00> : vector<1xf32>
    %85 = vector.multi_reduction <add>, %84, %cst_38 [1, 2] : vector<1x8x128xf32> to vector<1xf32>
    %86 = vector.shape_cast %85 : vector<1xf32> to vector<1x1x1xf32>
    %87 = vector.extract %86[0, 0, 0] : f32 from vector<1x1x1xf32>
    %88 = tpu.iota {dimensions = array<i32: 0>} : vector<8x128xi32>
    %89 = tpu.iota {dimensions = array<i32: 1>} : vector<8x128xi32>
    %c0_i32 = arith.constant 0 : i32
    %90 = vector.broadcast %c0_i32 : i32 to vector<8x128xi32>
    %91 = arith.cmpi eq, %88, %90 : vector<8x128xi32>
    %c0_i32_39 = arith.constant 0 : i32
    %92 = vector.broadcast %c0_i32_39 : i32 to vector<8x128xi32>
    %93 = arith.cmpi eq, %89, %92 : vector<8x128xi32>
    %94 = arith.andi %91, %93 : vector<8x128xi1>
    %cst_40 = arith.constant 0.000000e+00 : f32
    %95 = vector.broadcast %87 : f32 to vector<8x128xf32>
    %96 = vector.broadcast %cst_40 : f32 to vector<8x128xf32>
    %97 = arith.select %94, %95, %96 : vector<8x128xi1>, vector<8x128xf32>
    %c0_41 = arith.constant 0 : index
    %c0_42 = arith.constant 0 : index
    %c0_43 = arith.constant 0 : index
    %98 = vector.load %arg2[%c0_41, %c0_42, %c0_43] : memref<1x8x128xf32, #tpu.memory_space<vmem>>, vector<1x8x128xf32>
    %99 = vector.shape_cast %98 : vector<1x8x128xf32> to vector<8x128xf32>
    %100 = vector.shape_cast %97 : vector<8x128xf32> to vector<1x8x128xf32>
    tpu.vector_store %arg2[%c0_41, %c0_42, %c0_43], %100 {strides = array<i32>} : memref<1x8x128xf32, #tpu.memory_space<vmem>>, vector<1x8x128xf32>,
    return
  }
  func.func @transform_0(%arg0: i32) -> (i32, i32, i32, i32) {
    %c0_i32 = arith.constant 0 : i32
    %c0_i32_0 = arith.constant 0 : i32
    %c0_i32_1 = arith.constant 0 : i32
    %c0_i32_2 = arith.constant 0 : i32
    return %c0_i32, %c0_i32_0, %arg0, %c0_i32_1 : i32, i32, i32, i32
  }
  func.func @transform_1(%arg0: i32) -> (i32, i32, i32) {
    %c0_i32 = arith.constant 0 : i32
    %c0_i32_0 = arith.constant 0 : i32
    %c0_i32_1 = arith.constant 0 : i32
    return %arg0, %c0_i32, %c0_i32_0 : i32, i32, i32
  }
}

</mosaic_0001>

<llo_original>
// kernel: tpu_custom_call.1
$region0: #{tpu_custom_call.1}
  #allocation0 [shape = 'u32[]', space=smem, size = 0x4, offset = 0x4, fixed_abs, tag = 'smem constant byte address 0x4 - core index']
  #allocation1 [shape = 'u32[72,128]{1,0:T(1,128)}', space=vmem, size = 0x9000, scoped, tag = 'internal scratch']
  %s0 = inlined_call_operand.hbm [shape: f32[2,4,8,128], index: 0, kind: input, shape index: {}]
  %s1 = inlined_call_operand.hbm [shape: f32[1,8,128], index: 1, kind: output, shape index: {}]
  %s2 = sld [smem:[#allocation0]]
  $region18: #{tpu_custom_call.1} parent=0
    _
  %s4 = ssub.s32 1, %s2
  %s5 = scalar_select 0, %s4, %s2
  $region1: #{tpu_custom_call.1} parent=0
    #allocation2 [shape = 'u8[32768]{0}', space=vmem, size = 0x8000, scoped, tag = 'input window, operand 0, single buffered']
    #allocation3 [shape = 's32[1]{0}', space=sflag, size = 0x4, scoped, tag = 'scoped memory for tpu_custom_call.1']
    #allocation4 [shape = 's32[1]{0}', space=sflag, size = 0x4, scoped, tag = 'scoped memory for tpu_custom_call.1']
    #allocation5 [shape = 'u8[4096]{0}', space=vmem, size = 0x1000, scoped, tag = 'output window, operand 0, single buffered']
    %6 = vsyncpa [#allocation3], 0
    %7 = vsyncpa [#allocation4], 0
    // Predicated region
    $region2: #{tpu_custom_call.1} parent=1 // pred_check
      _
    $region3: #{tpu_custom_call.1} parent=1 // pred_check_branch
      %9 = sbr.rel (0) target = $region5
    $region4: #{tpu_custom_call.1} parent=1 // pred_region
      %11 = vsyncadd [#allocation3], 0
      %s12 = sshll.u32 %s0, 4
      %s13 = int_to_ptr.hbm [resolvable:$true] %s12
      %s14 = sshll.u32 [#allocation2], 4
      %s15 = int_to_ptr.vmem [resolvable:$true] %s14
      %20 = dma.hbm_to_vmem [thread:$0]  %s13, 1024, %s15, [#allocation3], 128, 128, 8
    $region5: #{tpu_custom_call.1} parent=1 // pred_fallthru
      _
    // Predicated region
    $region6: #{tpu_custom_call.1} parent=1 // pred_check
      _
    $region7: #{tpu_custom_call.1} parent=1 // pred_check_branch
      %22 = sbr.rel (0) target = $region9
    $region8: #{tpu_custom_call.1} parent=1 // pred_region
      %24 = dma.done [#allocation3], 1024
    $region9: #{tpu_custom_call.1} parent=1 // pred_fallthru
      _
    %v25 = vld [vmem:[#allocation2] sm:$0xff]
    %s26 = scalar_lea.vmem [#allocation2], 8
    %v27 = vld [vmem:[%s26] sm:$0xff]
    %s28 = scalar_lea.vmem [#allocation2], 16
    %v29 = vld [vmem:[%s28] sm:$0xff]
    %s30 = scalar_lea.vmem [#allocation2], 24
    %v31 = vld [vmem:[%s30] sm:$0xff]
    %s32 = scalar_lea.vmem [#allocation2], 32
    %v33 = vld [vmem:[%s32] sm:$0xff]
    %s34 = scalar_lea.vmem [#allocation2], 40
    %v35 = vld [vmem:[%s34] sm:$0xff]
    %s36 = scalar_lea.vmem [#allocation2], 48
    %v37 = vld [vmem:[%s36] sm:$0xff]
    %s38 = scalar_lea.vmem [#allocation2], 56
    %v39 = vld [vmem:[%s38] sm:$0xff]
    %v40 = vmin.f32 %v29, %v37
    %v41 = vmax.f32 %v25, %v33
    %v42 = vsub.f32 %v40, %v41
    %v43 = vmax.f32 %v42, 0.0
    %v44 = vmin.f32 %v31, %v39
    %v45 = vmax.f32 %v27, %v35
    %v46 = vsub.f32 %v44, %v45
    %v47 = vmax.f32 %v46, 0.0
    %v48 = vmul.f32 %v43, %v47
    %v49 = vsub.f32 %v29, %v25
    %v50 = vsub.f32 %v31, %v27
    %v51 = vmul.f32 %v49, %v50
    %v52 = vsub.f32 %v37, %v33
    %v53 = vsub.f32 %v39, %v35
    %v54 = vmul.f32 %v52, %v53
    %v55 = vadd.f32 %v51, %v54
    %v56 = vsub.f32 %v55, %v48
    %v57 = vadd.f32 %v56, 1e-06
    %v58 = vrcp.pop %v57
    %v59 = vmul.f32 %v57, %v58
    %v60 = vsub.f32 1.0, %v59
    %v61 = vmul.f32 %v58, %v60
    %v62 = vadd.f32 %v58, %v61
    %vm63 = vweird.f32 %v57
    %vm64 = vweird.f32 %v58
    %vm65 = vmor %vm63, %vm64
    %v66 = vsel %vm65, %v58, %v62
    %v67 = vand.u32 2147483647, %v57
    %vm68 = vcmp.eq.f32.partialorder %v67, 8.507059e+37
    %v69 = vand.u32 %v57, 2147483648
    %v70 = vor.u32 1.1754944e-38, %v69
    %v71 = vsel %vm68, %v70, %v66
    %v72 = vmul.f32 %v48, %v71
    %v73 = vmax.f32 %v29, %v37
    %v74 = vmin.f32 %v25, %v33
    %v75 = vsub.f32 %v73, %v74
    %v76 = vmax.f32 %v75, 0.0
    %v77 = vmax.f32 %v31, %v39
    %v78 = vmin.f32 %v27, %v35
    %v79 = vsub.f32 %v77, %v78
    %v80 = vmax.f32 %v79, 0.0
    %v81 = vmul.f32 %v76, %v76
    %v82 = vmul.f32 %v80, %v80
    %v83 = vadd.f32 %v81, %v82
    %v84 = vadd.f32 %v83, 1e-06
    %v85 = vadd.f32 %v33, %v37
    %v86 = vadd.f32 %v25, %v29
    %v87 = vsub.f32 %v85, %v86
    %v88 = vmul.f32 %v87, %v87
    %v89 = vmul.f32 %v88, 0.25
    %v90 = vadd.f32 %v35, %v39
    %v91 = vadd.f32 %v27, %v31
    %v92 = vsub.f32 %v90, %v91
    %v93 = vmul.f32 %v92, %v92
    %v94 = vmul.f32 %v93, 0.25
    %v95 = vadd.f32 %v89, %v94
    %v96 = vrcp.pop %v84
    %v97 = vmul.f32 %v84, %v96
    %v98 = vsub.f32 1.0, %v97
    %v99 = vmul.f32 %v96, %v98
    %v100 = vadd.f32 %v96, %v99
    %vm101 = vweird.f32 %v84
    %vm102 = vweird.f32 %v96
    %vm103 = vmor %vm101, %vm102
    %v104 = vsel %vm103, %v96, %v100
    %v105 = vand.u32 2147483647, %v84
    %vm106 = vcmp.eq.f32.partialorder %v105, 8.507059e+37
    %v107 = vand.u32 %v84, 2147483648
    %v108 = vor.u32 1.1754944e-38, %v107
    %v109 = vsel %vm106, %v108, %v104
    %v110 = vmul.f32 %v95, %v109
    %v111 = vsub.f32 %v72, %v110
    %v112 = vsub.f32 1.0, %v111
    %v113 = vlaneseq
    %v114 = vshrl.u32 %v113, 7
    %v115 = vlaneseq
    %v116 = vand.u32 %v115, 127
    %s117 = smul.u32 0, 8
    %v118 = vstv %s117
    %v119 = vadd.s32 %v118, %v114
    %v120 = vmul.u32 %v119, 128
    %v121 = vadd.s32 %v120, %v116
    %vm122 = vcmp.lt.s32.totalorder %v121, 8
    %v123 = vsel %vm122, %v112, 0.0
    %124 = vadd.xlane.f32.xlu0 %v123
    %v125 = vpop.xlane.xlu0 %124
    %v126 = vrot.slane %v125, 4
    %v127 = vadd.f32 %v125, %v126
    %v128 = vrot.slane %v127, 2
    %v129 = vadd.f32 %v127, %v128
    %v130 = vrot.slane %v129, 1
    %v131 = vadd.f32 %v129, %v130
    %s132 = vtos %v131
    %vm133 = vcmp.eq.s32.totalorder %v114, 0
    %vm134 = vcmp.eq.s32.totalorder %v116, 0
    %vm135 = vmand %vm133, %vm134
    %v136 = vstv %s132
    %v137 = vsel %vm135, %v136, 0.0
    %138 = vst [vmem:[#allocation5] sm:$0xff] %v137
    // Predicated region
    $region10: #{tpu_custom_call.1} parent=1 // pred_check
      _
    $region11: #{tpu_custom_call.1} parent=1 // pred_check_branch
      %140 = sbr.rel (0) target = $region13
    $region12: #{tpu_custom_call.1} parent=1 // pred_region
      %142 = vsyncadd [#allocation4], 0
      %s144 = sshll.u32 [#allocation5], 4
      %s145 = int_to_ptr.vmem [resolvable:$true] %s144
      %s146 = sshll.u32 %s1, 4
      %s147 = int_to_ptr.hbm [resolvable:$true] %s146
      %149 = dma.vmem_to_hbm [thread:$0]  %s145, 128, %s147, [#allocation4]
    $region13: #{tpu_custom_call.1} parent=1 // pred_fallthru
      _
    // Predicated region
    $region14: #{tpu_custom_call.1} parent=1 // pred_check
      _
    $region15: #{tpu_custom_call.1} parent=1 // pred_check_branch
      %151 = sbr.rel (0) target = $region17
    $region16: #{tpu_custom_call.1} parent=1 // pred_region
      %153 = dma.done [#allocation4], 128
    $region17: #{tpu_custom_call.1} parent=1 // pred_fallthru
      _
    %154 = vsyncpa [#allocation3], 1
    %155 = vsyncpa [#allocation4], 1

</llo_original>
